<compile_context>
chip_gen: v7x
topology: tpu7x:2x2x1
jax: 0.10.0
libtpu: 0.0.40
codegen_flags: <defaults>
</compile_context>

<pallas_src>
import functools
import math

import jax
import jax.numpy as jnp
from jax.experimental import pallas as pl
from jax.experimental.pallas import tpu as pltpu


def _round_up(v, m):
    return -(-v // m) * m


def kan_kernel(x_ref, wk_ref, wl_ref, b_ref, o_ref):
    # x_ref : (tm, pack*D)      packed input rows (compute dtype, bf16 default)
    # wk_ref: (pack*D, pack*K)  block-diagonal packed kernel_weights.T (resident)
    # wl_ref: (pack*K, pack*O)  block-diagonal packed linear weight.T  (resident)
    # b_ref : (1, pack*O)       tiled linear bias (f32, resident)
    # o_ref : (tm, pack*O)      packed output tile (lane-dense, caller dtype)
    x = x_ref[...]
    feats = jnp.dot(x, wk_ref[...], preferred_element_type=jnp.float32)
    feats = jnp.maximum(feats, 0.0).astype(wl_ref.dtype)   # bf16 into 2nd MXU pass
    out = jnp.dot(feats, wl_ref[...], preferred_element_type=jnp.float32)
    out = out + b_ref[...]
    o_ref[...] = out.astype(o_ref.dtype)


def pack_kan_params(kernel_weights, lin_weight, lin_bias, *, pack=16,
                    compute_dtype=jnp.bfloat16):
    """One-time parameter packing (hoist out of the per-call path).

    Builds block-diagonal, pre-transposed weights so `pack` consecutive rows of
    x are processed as one lane-dense row (pack*D, pack*K, pack*O >= 128 for
    the module's default sizes), and the output store is a full unmasked vst.
    """
    K, D = kernel_weights.shape
    O, K2 = lin_weight.shape
    assert K == K2
    eye = jnp.eye(pack, dtype=compute_dtype)
    wk_bd = jnp.einsum("pq,dk->pdqk", eye,
                       kernel_weights.T.astype(compute_dtype)
                       ).reshape(pack * D, pack * K)
    wl_bd = jnp.einsum("pq,ko->pkqo", eye,
                       lin_weight.T.astype(compute_dtype)
                       ).reshape(pack * K, pack * O)
    b_bd = jnp.tile(lin_bias.astype(jnp.float32), pack).reshape(1, pack * O)
    return wk_bd, wl_bd, b_bd


def kan_layer(x, kernel_weights, lin_weight, lin_bias, *, tm=512, pack=16,
              target_steps=8, compute_dtype=jnp.bfloat16, packed_params=None):
    """x: (..., D). Returns (..., O). Matches the PyTorch KANLayer forward."""
    D = x.shape[-1]
    K, D2 = kernel_weights.shape
    assert D == D2
    O, K2 = lin_weight.shape
    assert K == K2

    if packed_params is None:
        packed_params = pack_kan_params(kernel_weights, lin_weight, lin_bias,
                                        pack=pack, compute_dtype=compute_dtype)
    wk_bd, wl_bd, b_bd = packed_params
    compute_dtype = wk_bd.dtype
    PD, PK, PO = pack * D, pack * K, pack * O
    assert wk_bd.shape == (PD, PK) and wl_bd.shape == (PK, PO)
    out_dtype = x.dtype

    lead = x.shape[:-1]
    M = math.prod(lead) if lead else 1
    Mp = pl.cdiv(M, pack)                      # packed rows needed

    # Size the row tile for ~target_steps grid steps (>= 2 per v7x TensorCore
    # when M is large enough) so double-buffering overlaps DMA and compute,
    # while never exceeding `tm` (VMEM budget) or the array extent.
    tm_eff = _round_up(pl.cdiv(Mp, target_steps), 16)
    tm_eff = max(16, min(tm, tm_eff))
    tm_eff = min(tm_eff, _round_up(Mp, 16))
    grid_m = pl.cdiv(Mp, tm_eff)
    Mp_pad = grid_m * tm_eff
    M_pad = Mp_pad * pack

    # Single fused preprocessing pass: cast -> (small) row pad -> pack rows.
    x2 = x.reshape(M, D).astype(compute_dtype)
    if M_pad != M:
        x2 = jnp.pad(x2, ((0, M_pad - M), (0, 0)))
    xp = x2.reshape(Mp_pad, PD)                # row-major packing of `pack` rows

    c_bytes = jnp.dtype(compute_dtype).itemsize
    o_bytes = jnp.dtype(out_dtype).itemsize
    cost = pl.CostEstimate(
        flops=int(2 * Mp_pad * (PD * PK + PK * PO)),
        transcendentals=0,
        bytes_accessed=int(c_bytes * Mp_pad * PD + o_bytes * Mp_pad * PO
                           + c_bytes * (PD * PK + PK * PO) + 4 * PO),
    )

    out_packed = pl.pallas_call(
        kan_kernel,
        out_shape=jax.ShapeDtypeStruct((Mp_pad, PO), out_dtype),
        grid_spec=pltpu.PrefetchScalarGridSpec(
            num_scalar_prefetch=0,
            grid=(grid_m,),
            in_specs=[
                pl.BlockSpec((tm_eff, PD), lambda i: (i, 0)),  # packed x rows
                pl.BlockSpec((PD, PK), lambda i: (0, 0)),      # Wk (resident)
                pl.BlockSpec((PK, PO), lambda i: (0, 0)),      # Wl (resident)
                pl.BlockSpec((1, PO), lambda i: (0, 0)),       # bias (resident)
            ],
            out_specs=pl.BlockSpec((tm_eff, PO), lambda i: (i, 0)),
        ),
        compiler_params=pltpu.CompilerParams(
            dimension_semantics=("parallel",)),
        cost_estimate=cost,
    )(xp, wk_bd, wl_bd, b_bd)

    # Unpack rows; the [:M] slice fuses into this single output pass.
    out = out_packed.reshape(M_pad, O)
    if M_pad != M:
        out = out[:M]
    return out.reshape(*lead, O)


def kan_reference(x, kernel_weights, lin_weight, lin_bias):
    feats = jnp.maximum(jnp.einsum("...d,kd->...k", x, kernel_weights), 0.0)
    return jnp.einsum("...k,ok->...o", feats, lin_weight) + lin_bias


if __name__ == "__main__":
    # Small shapes consistent with the module: input_dim=32, output_dim=16, kernel_size=8
    batch, seq, input_dim = 2, 8, 32
    kernel_size, output_dim = 8, 16

    key = jax.random.PRNGKey(0)
    kx, kw, kl, kb = jax.random.split(key, 4)

    x = jax.random.normal(kx, (batch, seq, input_dim), dtype=jnp.float32)
    kernel_weights = jax.random.normal(kw, (kernel_size, input_dim), dtype=jnp.float32)
    bound = 1.0 / (kernel_size ** 0.5)
    lin_weight = jax.random.uniform(kl, (output_dim, kernel_size),
                                    minval=-bound, maxval=bound, dtype=jnp.float32)
    lin_bias = jax.random.uniform(kb, (output_dim,),
                                  minval=-bound, maxval=bound, dtype=jnp.float32)

    ref = kan_reference(x, kernel_weights, lin_weight, lin_bias)

    # 1) Exact f32 compute path: validates packing / tiling structure bit-for-bit.
    out32 = kan_layer(x, kernel_weights, lin_weight, lin_bias,
                      compute_dtype=jnp.float32)
    jax.block_until_ready(out32)
    assert out32.shape == (batch, seq, output_dim)
    assert jnp.allclose(out32, ref, atol=1e-5, rtol=1e-5), "mismatch (f32 path)"

    # 2) Default bf16 fast path with parameter packing hoisted out of the call.
    pp = pack_kan_params(kernel_weights, lin_weight, lin_bias)
    kan_fn = jax.jit(functools.partial(
        kan_layer, kernel_weights=kernel_weights, lin_weight=lin_weight,
        lin_bias=lin_bias, packed_params=pp))
    out = kan_fn(x)
    jax.block_until_ready(out)
    assert out.shape == (batch, seq, output_dim)
    assert jnp.allclose(out, ref, atol=2e-1, rtol=5e-2), "mismatch (bf16 path)"
    assert float(jnp.mean(jnp.abs(out - ref))) < 5e-2

    # 3) Larger, non-tile-divisible M: multi-step grid + padded-tail handling.
    xb = jax.random.normal(kx, (3, 1000, input_dim), dtype=jnp.float32)
    outb = kan_fn(xb)
    jax.block_until_ready(outb)
    refb = kan_reference(xb, kernel_weights, lin_weight, lin_bias)
    assert outb.shape == (3, 1000, output_dim)
    assert jnp.allclose(outb, refb, atol=2e-1, rtol=5e-2), "mismatch (large M)"
    assert float(jnp.mean(jnp.abs(outb - refb))) < 5e-2

    print("KERNEL_OK")
</pallas_src>

<mosaic_0001>
module attributes {stable_mosaic.version = 11 : i64} {
  func.func @kan_kernel(%arg0: i32, %arg1: memref<16x512xf32, #tpu.memory_space<vmem>>, %arg2: memref<512x128xf32, #tpu.memory_space<vmem>>, %arg3: memref<128x256xf32, #tpu.memory_space<vmem>>, %arg4: memref<1x256xf32, #tpu.memory_space<vmem>>, %arg5: memref<16x256xf32, #tpu.memory_space<vmem>>) attributes {dimension_semantics = [#tpu.dimension_semantics<parallel>], iteration_bounds = array<i64: 1>, scalar_prefetch = 0 : i64, scratch_operands = 0 : i64, tpu.core_type = #tpu.core_type<tc>, window_params = [{transform_indices = @transform_0, window_bounds = array<i64: 16, 512>}, {pipeline_mode = #tpu.pipeline_mode<synchronous>, transform_indices = @transform_1, window_bounds = array<i64: 512, 128>}, {pipeline_mode = #tpu.pipeline_mode<synchronous>, transform_indices = @transform_2, window_bounds = array<i64: 128, 256>}, {pipeline_mode = #tpu.pipeline_mode<synchronous>, transform_indices = @transform_3, window_bounds = array<i64: 1, 256>}, {transform_indices = @transform_4, window_bounds = array<i64: 16, 256>}]} {
    %c0 = arith.constant 0 : index
    %c0_0 = arith.constant 0 : index
    %0 = vector.load %arg1[%c0, %c0_0] : memref<16x512xf32, #tpu.memory_space<vmem>>, vector<16x512xf32>
    %c0_1 = arith.constant 0 : index
    %c0_2 = arith.constant 0 : index
    %1 = vector.load %arg2[%c0_1, %c0_2] : memref<512x128xf32, #tpu.memory_space<vmem>>, vector<512x128xf32>
    %cst = arith.constant dense<0.000000e+00> : vector<16x128xf32>
    %2 = tpu.matmul %0, %1, %cst {dimension_numbers = #tpu.dot_dimension_numbers<[1], [0], [0], [1], [0, 0, 1, 1], [], []>} : vector<16x512xf32>, vector<512x128xf32>, vector<16x128xf32> -> vector<16x128xf32>
    %cst_3 = arith.constant 0.000000e+00 : f32
    %3 = vector.broadcast %cst_3 : f32 to vector<16x128xf32>
    %4 = arith.maximumf %2, %3 : vector<16x128xf32>
    %c0_4 = arith.constant 0 : index
    %c0_5 = arith.constant 0 : index
    %5 = vector.load %arg3[%c0_4, %c0_5] : memref<128x256xf32, #tpu.memory_space<vmem>>, vector<128x256xf32>
    %cst_6 = arith.constant dense<0.000000e+00> : vector<16x256xf32>
    %6 = tpu.matmul %4, %5, %cst_6 {dimension_numbers = #tpu.dot_dimension_numbers<[1], [0], [0], [1], [0, 0, 1, 1], [], []>} : vector<16x128xf32>, vector<128x256xf32>, vector<16x256xf32> -> vector<16x256xf32>
    %c0_7 = arith.constant 0 : index
    %c0_8 = arith.constant 0 : index
    %7 = vector.load %arg4[%c0_7, %c0_8] : memref<1x256xf32, #tpu.memory_space<vmem>>, vector<1x256xf32>
    %8 = vector.broadcast %7 : vector<1x256xf32> to vector<16x256xf32>
    %9 = arith.addf %6, %8 : vector<16x256xf32>
    %c0_9 = arith.constant 0 : index
    %c0_10 = arith.constant 0 : index
    %10 = vector.load %arg5[%c0_9, %c0_10] : memref<16x256xf32, #tpu.memory_space<vmem>>, vector<16x256xf32>
    tpu.vector_store %arg5[%c0_9, %c0_10], %9 {strides = array<i32>} : memref<16x256xf32, #tpu.memory_space<vmem>>, vector<16x256xf32>,
    return
  }
  func.func @transform_0(%arg0: i32) -> (i32, i32) {
    %c0_i32 = arith.constant 0 : i32
    %c0_i32_0 = arith.constant 0 : i32
    return %arg0, %c0_i32 : i32, i32
  }
  func.func @transform_1(%arg0: i32) -> (i32, i32) {
    %c0_i32 = arith.constant 0 : i32
    %c0_i32_0 = arith.constant 0 : i32
    %c0_i32_1 = arith.constant 0 : i32
    return %c0_i32, %c0_i32_0 : i32, i32
  }
  func.func @transform_2(%arg0: i32) -> (i32, i32) {
    %c0_i32 = arith.constant 0 : i32
    %c0_i32_0 = arith.constant 0 : i32
    %c0_i32_1 = arith.constant 0 : i32
    return %c0_i32, %c0_i32_0 : i32, i32
  }
  func.func @transform_3(%arg0: i32) -> (i32, i32) {
    %c0_i32 = arith.constant 0 : i32
    %c0_i32_0 = arith.constant 0 : i32
    %c0_i32_1 = arith.constant 0 : i32
    return %c0_i32, %c0_i32_0 : i32, i32
  }
  func.func @transform_4(%arg0: i32) -> (i32, i32) {
    %c0_i32 = arith.constant 0 : i32
    %c0_i32_0 = arith.constant 0 : i32
    return %arg0, %c0_i32 : i32, i32
  }
}

</mosaic_0001>

<llo_original>
// kernel: tpu_custom_call.1
$region0: #{tpu_custom_call.1}
  #allocation0 [shape = 'u32[]', space=smem, size = 0x4, offset = 0x4, fixed_abs, tag = 'smem constant byte address 0x4 - core index']
  #allocation1 [shape = 'u32[144,128]{1,0:T(1,128)}', space=vmem, size = 0x12000, scoped, tag = 'internal scratch']
  %s0 = inlined_call_operand.hbm [shape: f32[16,512], index: 0, kind: input, shape index: {}]
  %s1 = inlined_call_operand.hbm [shape: f32[512,128], index: 1, kind: input, shape index: {}]
  %s2 = inlined_call_operand.hbm [shape: f32[128,256], index: 2, kind: input, shape index: {}]
  %s3 = inlined_call_operand.vmem [shape: f32[1,256], index: 3, kind: input, shape index: {}]
  %s4 = inlined_call_operand.hbm [shape: f32[16,256], index: 4, kind: output, shape index: {}]
  %s5 = sld [smem:[#allocation0]]
  $region38: #{tpu_custom_call.1} parent=0
    _
  %s7 = ssub.s32 1, %s5
  %s8 = scalar_select 0, %s7, %s5
  $region1: #{tpu_custom_call.1} parent=0
    #allocation2 [shape = 'u8[32768]{0}', space=vmem, size = 0x8000, scoped, tag = 'input window, operand 0, single buffered']
    #allocation3 [shape = 's32[1]{0}', space=sflag, size = 0x4, scoped, tag = 'scoped memory for tpu_custom_call.1']
    #allocation4 [shape = 's32[1]{0}', space=sflag, size = 0x4, scoped, tag = 'scoped memory for tpu_custom_call.1']
    #allocation5 [shape = 'u8[262144]{0}', space=vmem, size = 0x40000, scoped, tag = 'input window, operand 1, single buffered']
    #allocation6 [shape = 's32[1]{0}', space=sflag, size = 0x4, scoped, tag = 'scoped memory for tpu_custom_call.1']
    #allocation7 [shape = 'u8[131072]{0}', space=vmem, size = 0x20000, scoped, tag = 'input window, operand 2, single buffered']
    #allocation8 [shape = 'u8[16384]{0}', space=vmem, size = 0x4000, scoped, tag = 'output window, operand 0, single buffered']
    %9 = vsyncpa [#allocation3], 0
    %10 = vsyncpa [#allocation6], 0
    %11 = vsyncpa [#allocation4], 0
    // Predicated region
    $region2: #{tpu_custom_call.1} parent=1 // pred_check
      _
    $region3: #{tpu_custom_call.1} parent=1 // pred_check_branch
      %13 = sbr.rel (0) target = $region5
    $region4: #{tpu_custom_call.1} parent=1 // pred_region
      %s15 = ssub.s32 1024, 1024
      %16 = vsyncadd [#allocation3], %s15
      %s17 = sshll.u32 [#allocation2], 4
      %s18 = int_to_ptr.vmem [resolvable:$true] %s17
      %23 = dma.hbm_to_vmem [thread:$0]  %s0, 1024, %s18, [#allocation3], 512, 512, 32
    $region5: #{tpu_custom_call.1} parent=1 // pred_fallthru
      _
    // Predicated region
    $region6: #{tpu_custom_call.1} parent=1 // pred_check
      _
    $region7: #{tpu_custom_call.1} parent=1 // pred_check_branch
      %25 = sbr.rel (0) target = $region9
    $region8: #{tpu_custom_call.1} parent=1 // pred_region
      %s27 = ssub.s32 8192, 8192
      %28 = vsyncadd [#allocation6], %s27
      %s29 = sshll.u32 [#allocation5], 4
      %s30 = int_to_ptr.vmem [resolvable:$true] %s29
      %35 = dma.hbm_to_vmem [thread:$0]  %s1, 8192, %s30, [#allocation6], 128, 128, 8
    $region9: #{tpu_custom_call.1} parent=1 // pred_fallthru
      _
    // Predicated region
    $region10: #{tpu_custom_call.1} parent=1 // pred_check
      _
    $region11: #{tpu_custom_call.1} parent=1 // pred_check_branch
      %37 = sbr.rel (0) target = $region13
    $region12: #{tpu_custom_call.1} parent=1 // pred_region
      %s39 = ssub.s32 4096, 4096
      %40 = vsyncadd [#allocation6], %s39
      %s41 = sshll.u32 [#allocation7], 4
      %s42 = int_to_ptr.vmem [resolvable:$true] %s41
      %47 = dma.hbm_to_vmem [thread:$0]  %s2, 4096, %s42, [#allocation6], 256, 256, 16
    $region13: #{tpu_custom_call.1} parent=1 // pred_fallthru
      _
    // Predicated region
    $region14: #{tpu_custom_call.1} parent=1 // pred_check
      _
    $region15: #{tpu_custom_call.1} parent=1 // pred_check_branch
      %49 = sbr.rel (0) target = $region17
    $region16: #{tpu_custom_call.1} parent=1 // pred_region
      _
    $region17: #{tpu_custom_call.1} parent=1 // pred_fallthru
      _
    // Predicated region
    $region18: #{tpu_custom_call.1} parent=1 // pred_check
      _
    $region19: #{tpu_custom_call.1} parent=1 // pred_check_branch
      %51 = sbr.rel (0) target = $region21
    $region20: #{tpu_custom_call.1} parent=1 // pred_region
      %52 = dma.done [#allocation3], 1024
    $region21: #{tpu_custom_call.1} parent=1 // pred_fallthru
      _
    // Predicated region
    $region22: #{tpu_custom_call.1} parent=1 // pred_check
      _
    $region23: #{tpu_custom_call.1} parent=1 // pred_check_branch
      %54 = sbr.rel (0) target = $region25
    $region24: #{tpu_custom_call.1} parent=1 // pred_region
      %55 = dma.done [#allocation6], 8192
    $region25: #{tpu_custom_call.1} parent=1 // pred_fallthru
      _
    // Predicated region
    $region26: #{tpu_custom_call.1} parent=1 // pred_check
      _
    $region27: #{tpu_custom_call.1} parent=1 // pred_check_branch
      %57 = sbr.rel (0) target = $region29
    $region28: #{tpu_custom_call.1} parent=1 // pred_region
      %58 = dma.done [#allocation6], 4096
    $region29: #{tpu_custom_call.1} parent=1 // pred_fallthru
      _
    %v59 = vld [vmem:[#allocation2] sm:$0xff]
    %v60 = vld [vmem:[#allocation2 + $0x8] sm:$0xff]
    %v61 = vld [vmem:[#allocation2 + $0x10] sm:$0xff]
    %v62 = vld [vmem:[#allocation2 + $0x18] sm:$0xff]
    %v63 = vld [vmem:[#allocation2 + $0x20] sm:$0xff]
    %v64 = vld [vmem:[#allocation2 + $0x28] sm:$0xff]
    %v65 = vld [vmem:[#allocation2 + $0x30] sm:$0xff]
    %v66 = vld [vmem:[#allocation2 + $0x38] sm:$0xff]
    %v67 = vld [vmem:[#allocation5] sm:$0xff]
    %v68 = vld [vmem:[#allocation5 + $0x8] sm:$0xff]
    %v69 = vld [vmem:[#allocation5 + $0x10] sm:$0xff]
    %v70 = vld [vmem:[#allocation5 + $0x18] sm:$0xff]
    %v71 = vld [vmem:[#allocation5 + $0x20] sm:$0xff]
    %v72 = vld [vmem:[#allocation5 + $0x28] sm:$0xff]
    %v73 = vld [vmem:[#allocation5 + $0x30] sm:$0xff]
    %v74 = vld [vmem:[#allocation5 + $0x38] sm:$0xff]
    %v75 = vld [vmem:[#allocation5 + $0x40] sm:$0xff]
    %v76 = vld [vmem:[#allocation5 + $0x48] sm:$0xff]
    %v77 = vld [vmem:[#allocation5 + $0x50] sm:$0xff]
    %v78 = vld [vmem:[#allocation5 + $0x58] sm:$0xff]
    %v79 = vld [vmem:[#allocation5 + $0x60] sm:$0xff]
    %v80 = vld [vmem:[#allocation5 + $0x68] sm:$0xff]
    %v81 = vld [vmem:[#allocation5 + $0x70] sm:$0xff]
    %v82 = vld [vmem:[#allocation5 + $0x78] sm:$0xff]
    %v83 = vld [vmem:[#allocation5 + $0x80] sm:$0xff]
    %v84 = vld [vmem:[#allocation5 + $0x88] sm:$0xff]
    %v85 = vld [vmem:[#allocation5 + $0x90] sm:$0xff]
    %v86 = vld [vmem:[#allocation5 + $0x98] sm:$0xff]
    %v87 = vld [vmem:[#allocation5 + $0xa0] sm:$0xff]
    %v88 = vld [vmem:[#allocation5 + $0xa8] sm:$0xff]
    %v89 = vld [vmem:[#allocation5 + $0xb0] sm:$0xff]
    %v90 = vld [vmem:[#allocation5 + $0xb8] sm:$0xff]
    %v91 = vld [vmem:[#allocation5 + $0xc0] sm:$0xff]
    %v92 = vld [vmem:[#allocation5 + $0xc8] sm:$0xff]
    %v93 = vld [vmem:[#allocation5 + $0xd0] sm:$0xff]
    %v94 = vld [vmem:[#allocation5 + $0xd8] sm:$0xff]
    %v95 = vld [vmem:[#allocation5 + $0xe0] sm:$0xff]
    %v96 = vld [vmem:[#allocation5 + $0xe8] sm:$0xff]
    %v97 = vld [vmem:[#allocation5 + $0xf0] sm:$0xff]
    %v98 = vld [vmem:[#allocation5 + $0xf8] sm:$0xff]
    %v99 = vld [vmem:[#allocation5 + $0x100] sm:$0xff]
    %v100 = vld [vmem:[#allocation5 + $0x108] sm:$0xff]
    %v101 = vld [vmem:[#allocation5 + $0x110] sm:$0xff]
    %v102 = vld [vmem:[#allocation5 + $0x118] sm:$0xff]
    %v103 = vld [vmem:[#allocation5 + $0x120] sm:$0xff]
    %v104 = vld [vmem:[#allocation5 + $0x128] sm:$0xff]
    %v105 = vld [vmem:[#allocation5 + $0x130] sm:$0xff]
    %v106 = vld [vmem:[#allocation5 + $0x138] sm:$0xff]
    %v107 = vld [vmem:[#allocation5 + $0x140] sm:$0xff]
    %v108 = vld [vmem:[#allocation5 + $0x148] sm:$0xff]
    %v109 = vld [vmem:[#allocation5 + $0x150] sm:$0xff]
    %v110 = vld [vmem:[#allocation5 + $0x158] sm:$0xff]
    %v111 = vld [vmem:[#allocation5 + $0x160] sm:$0xff]
    %v112 = vld [vmem:[#allocation5 + $0x168] sm:$0xff]
    %v113 = vld [vmem:[#allocation5 + $0x170] sm:$0xff]
    %v114 = vld [vmem:[#allocation5 + $0x178] sm:$0xff]
    %v115 = vld [vmem:[#allocation5 + $0x180] sm:$0xff]
    %v116 = vld [vmem:[#allocation5 + $0x188] sm:$0xff]
    %v117 = vld [vmem:[#allocation5 + $0x190] sm:$0xff]
    %v118 = vld [vmem:[#allocation5 + $0x198] sm:$0xff]
    %v119 = vld [vmem:[#allocation5 + $0x1a0] sm:$0xff]
    %v120 = vld [vmem:[#allocation5 + $0x1a8] sm:$0xff]
    %v121 = vld [vmem:[#allocation5 + $0x1b0] sm:$0xff]
    %v122 = vld [vmem:[#allocation5 + $0x1b8] sm:$0xff]
    %v123 = vld [vmem:[#allocation5 + $0x1c0] sm:$0xff]
    %v124 = vld [vmem:[#allocation5 + $0x1c8] sm:$0xff]
    %v125 = vld [vmem:[#allocation5 + $0x1d0] sm:$0xff]
    %v126 = vld [vmem:[#allocation5 + $0x1d8] sm:$0xff]
    %v127 = vld [vmem:[#allocation5 + $0x1e0] sm:$0xff]
    %v128 = vld [vmem:[#allocation5 + $0x1e8] sm:$0xff]
    %v129 = vld [vmem:[#allocation5 + $0x1f0] sm:$0xff]
    %v130 = vld [vmem:[#allocation5 + $0x1f8] sm:$0xff]
    %131 = vmatprep.subr.mxu0 0.0
    %132 = vmatpush1.msra.mxu0 %v67
    %133 = vmatprep.subr.mxu0 0.0
    %134 = vmatpush1.msra.mxu0 %v68
    %135 = vmatprep.subr.mxu0 0.0
    %136 = vmatpush1.msra.mxu0 %v69
    %137 = vmatprep.subr.mxu0 0.0
    %138 = vmatpush1.msra.mxu0 %v70
    %139 = vmatprep.subr.mxu0 0.0
    %140 = vmatpush1.msra.mxu0 %v71
    %141 = vmatprep.subr.mxu0 0.0
    %142 = vmatpush1.msra.mxu0 %v72
    %143 = vmatprep.subr.mxu0 0.0
    %144 = vmatpush1.msra.mxu0 %v73
    %145 = vmatprep.subr.mxu0 0.0
    %146 = vmatpush1.msra.mxu0 %v74
    %147 = vmatprep.subr.mxu0 0.0
    %148 = vmatpush1.msra.mxu0 %v75
    %149 = vmatprep.subr.mxu0 0.0
    %150 = vmatpush1.msra.mxu0 %v76
    %151 = vmatprep.subr.mxu0 0.0
    %152 = vmatpush1.msra.mxu0 %v77
    %153 = vmatprep.subr.mxu0 0.0
    %154 = vmatpush1.msra.mxu0 %v78
    %155 = vmatprep.subr.mxu0 0.0
    %156 = vmatpush1.msra.mxu0 %v79
    %157 = vmatprep.subr.mxu0 0.0
    %158 = vmatpush1.msra.mxu0 %v80
    %159 = vmatprep.subr.mxu0 0.0
    %160 = vmatpush1.msra.mxu0 %v81
    %161 = vmatprep.subr.mxu0 0.0
    %162 = vmatpush1.msra.mxu0 %v82
    %163 = vmatprep.subr.mxu0 0.0
    %164 = vmatpush1.msra.mxu0 %v83
    %165 = vmatprep.subr.mxu0 0.0
    %166 = vmatpush1.msra.mxu0 %v84
    %167 = vmatprep.subr.mxu0 0.0
    %168 = vmatpush1.msra.mxu0 %v85
    %169 = vmatprep.subr.mxu0 0.0
    %170 = vmatpush1.msra.mxu0 %v86
    %171 = vmatprep.subr.mxu0 0.0
    %172 = vmatpush1.msra.mxu0 %v87
    %173 = vmatprep.subr.mxu0 0.0
    %174 = vmatpush1.msra.mxu0 %v88
    %175 = vmatprep.subr.mxu0 0.0
    %176 = vmatpush1.msra.mxu0 %v89
    %177 = vmatprep.subr.mxu0 0.0
    %178 = vmatpush1.msra.mxu0 %v90
    %179 = vmatprep.subr.mxu0 0.0
    %180 = vmatpush1.msra.mxu0 %v91
    %181 = vmatprep.subr.mxu0 0.0
    %182 = vmatpush1.msra.mxu0 %v92
    %183 = vmatprep.subr.mxu0 0.0
    %184 = vmatpush1.msra.mxu0 %v93
    %185 = vmatprep.subr.mxu0 0.0
    %186 = vmatpush1.msra.mxu0 %v94
    %187 = vmatprep.subr.mxu0 0.0
    %188 = vmatpush1.msra.mxu0 %v95
    %189 = vmatprep.subr.mxu0 0.0
    %190 = vmatpush1.msra.mxu0 %v96
    %191 = vmatprep.subr.mxu0 0.0
    %192 = vmatpush1.msra.mxu0 %v97
    %193 = vmatprep.subr.mxu0 0.0
    %194 = vmatpush1.msra.mxu0 %v98
    %195 = vmatprep.mubr.f32.mxu0 %v60
    %196 = vmatmul.mubr.f32.gmra.mrb[0].mxu0 %v59
    %v197 = vpop.f32.mrb[0].mxu0
    %v198 = vadd.f32 0.0, %v197
    %v199 = vpop.f32.mrb[0].mxu0
    %200 = vmatprep.mubr.f32.mxu0 %v64
    %201 = vmatmul.mubr.f32.gmra.mrb[0].mxu0 %v63
    %v202 = vpop.f32.mrb[0].mxu0
    %v203 = vadd.f32 0.0, %v202
    %v204 = vpop.f32.mrb[0].mxu0
    %205 = vdwg.mxu0
    %206 = vmatprep.subr.mxu0 0.0
    %207 = vmatpush1.msra.mxu0 %v99
    %208 = vmatprep.subr.mxu0 0.0
    %209 = vmatpush1.msra.mxu0 %v100
    %210 = vmatprep.subr.mxu0 0.0
    %211 = vmatpush1.msra.mxu0 %v101
    %212 = vmatprep.subr.mxu0 0.0
    %213 = vmatpush1.msra.mxu0 %v102
    %214 = vmatprep.subr.mxu0 0.0
    %215 = vmatpush1.msra.mxu0 %v103
    %216 = vmatprep.subr.mxu0 0.0
    %217 = vmatpush1.msra.mxu0 %v104
    %218 = vmatprep.subr.mxu0 0.0
    %219 = vmatpush1.msra.mxu0 %v105
    %220 = vmatprep.subr.mxu0 0.0
    %221 = vmatpush1.msra.mxu0 %v106
    %222 = vmatprep.subr.mxu0 0.0
    %223 = vmatpush1.msra.mxu0 %v107
    %224 = vmatprep.subr.mxu0 0.0
    %225 = vmatpush1.msra.mxu0 %v108
    %226 = vmatprep.subr.mxu0 0.0
    %227 = vmatpush1.msra.mxu0 %v109
    %228 = vmatprep.subr.mxu0 0.0
    %229 = vmatpush1.msra.mxu0 %v110
    %230 = vmatprep.subr.mxu0 0.0
    %231 = vmatpush1.msra.mxu0 %v111
    %232 = vmatprep.subr.mxu0 0.0
    %233 = vmatpush1.msra.mxu0 %v112
    %234 = vmatprep.subr.mxu0 0.0
    %235 = vmatpush1.msra.mxu0 %v113
    %236 = vmatprep.subr.mxu0 0.0
    %237 = vmatpush1.msra.mxu0 %v114
    %238 = vmatprep.subr.mxu0 0.0
    %239 = vmatpush1.msra.mxu0 %v115
    %240 = vmatprep.subr.mxu0 0.0
    %241 = vmatpush1.msra.mxu0 %v116
    %242 = vmatprep.subr.mxu0 0.0
    %243 = vmatpush1.msra.mxu0 %v117
    %244 = vmatprep.subr.mxu0 0.0
    %245 = vmatpush1.msra.mxu0 %v118
    %246 = vmatprep.subr.mxu0 0.0
    %247 = vmatpush1.msra.mxu0 %v119
    %248 = vmatprep.subr.mxu0 0.0
    %249 = vmatpush1.msra.mxu0 %v120
    %250 = vmatprep.subr.mxu0 0.0
    %251 = vmatpush1.msra.mxu0 %v121
    %252 = vmatprep.subr.mxu0 0.0
    %253 = vmatpush1.msra.mxu0 %v122
    %254 = vmatprep.subr.mxu0 0.0
    %255 = vmatpush1.msra.mxu0 %v123
    %256 = vmatprep.subr.mxu0 0.0
    %257 = vmatpush1.msra.mxu0 %v124
    %258 = vmatprep.subr.mxu0 0.0
    %259 = vmatpush1.msra.mxu0 %v125
    %260 = vmatprep.subr.mxu0 0.0
    %261 = vmatpush1.msra.mxu0 %v126
    %262 = vmatprep.subr.mxu0 0.0
    %263 = vmatpush1.msra.mxu0 %v127
    %264 = vmatprep.subr.mxu0 0.0
    %265 = vmatpush1.msra.mxu0 %v128
    %266 = vmatprep.subr.mxu0 0.0
    %267 = vmatpush1.msra.mxu0 %v129
    %268 = vmatprep.subr.mxu0 0.0
    %269 = vmatpush1.msra.mxu0 %v130
    %270 = vmatprep.mubr.f32.mxu0 %v62
    %271 = vmatmul.mubr.f32.gmra.mrb[0].mxu0 %v61
    %v272 = vpop.f32.mrb[0].mxu0
    %v273 = vadd.f32 %v198, %v272
    %v274 = vpop.f32.mrb[0].mxu0
    %275 = vmatprep.mubr.f32.mxu0 %v66
    %276 = vmatmul.mubr.f32.gmra.mrb[0].mxu0 %v65
    %v277 = vpop.f32.mrb[0].mxu0
    %v278 = vadd.f32 %v203, %v277
    %v279 = vpop.f32.mrb[0].mxu0
    %280 = vdwg.mxu0
    %v281 = vmax.f32 %v273, 0.0
    %v282 = vmax.f32 %v278, 0.0
    %v283 = vld [vmem:[#allocation7] sm:$0xff]
    %v284 = vld [vmem:[#allocation7 + $0x8] sm:$0xff]
    %v285 = vld [vmem:[#allocation7 + $0x10] sm:$0xff]
    %v286 = vld [vmem:[#allocation7 + $0x18] sm:$0xff]
    %v287 = vld [vmem:[#allocation7 + $0x20] sm:$0xff]
    %v288 = vld [vmem:[#allocation7 + $0x28] sm:$0xff]
    %v289 = vld [vmem:[#allocation7 + $0x30] sm:$0xff]
    %v290 = vld [vmem:[#allocation7 + $0x38] sm:$0xff]
    %v291 = vld [vmem:[#allocation7 + $0x40] sm:$0xff]
    %v292 = vld [vmem:[#allocation7 + $0x48] sm:$0xff]
    %v293 = vld [vmem:[#allocation7 + $0x50] sm:$0xff]
    %v294 = vld [vmem:[#allocation7 + $0x58] sm:$0xff]
    %v295 = vld [vmem:[#allocation7 + $0x60] sm:$0xff]
    %v296 = vld [vmem:[#allocation7 + $0x68] sm:$0xff]
    %v297 = vld [vmem:[#allocation7 + $0x70] sm:$0xff]
    %v298 = vld [vmem:[#allocation7 + $0x78] sm:$0xff]
    %v299 = vld [vmem:[#allocation7 + $0x80] sm:$0xff]
    %v300 = vld [vmem:[#allocation7 + $0x88] sm:$0xff]
    %v301 = vld [vmem:[#allocation7 + $0x90] sm:$0xff]
    %v302 = vld [vmem:[#allocation7 + $0x98] sm:$0xff]
    %v303 = vld [vmem:[#allocation7 + $0xa0] sm:$0xff]
    %v304 = vld [vmem:[#allocation7 + $0xa8] sm:$0xff]
    %v305 = vld [vmem:[#allocation7 + $0xb0] sm:$0xff]
    %v306 = vld [vmem:[#allocation7 + $0xb8] sm:$0xff]
    %v307 = vld [vmem:[#allocation7 + $0xc0] sm:$0xff]
    %v308 = vld [vmem:[#allocation7 + $0xc8] sm:$0xff]
    %v309 = vld [vmem:[#allocation7 + $0xd0] sm:$0xff]
    %v310 = vld [vmem:[#allocation7 + $0xd8] sm:$0xff]
    %v311 = vld [vmem:[#allocation7 + $0xe0] sm:$0xff]
    %v312 = vld [vmem:[#allocation7 + $0xe8] sm:$0xff]
    %v313 = vld [vmem:[#allocation7 + $0xf0] sm:$0xff]
    %v314 = vld [vmem:[#allocation7 + $0xf8] sm:$0xff]
    %v315 = vld [vmem:[%s3] sm:$0x3]
    %v317 = vlaneseq
    %v318 = vshrl.u32 %v317, 7
    %v319 = vsub.s32 0, %v318
    %v320 = vrot.slane %v315, %v319
    %v321 = vlaneseq
    %v322 = vshrl.u32 %v321, 7
    %v323 = vsub.s32 1, %v322
    %v324 = vrot.slane %v315, %v323
    %327 = vmatprep.subr.mxu0 %v284
    %328 = vmatpush1.msra.mxu0 %v283
    %329 = vmatprep.subr.mxu0 %v286
    %330 = vmatpush1.msra.mxu0 %v285
    %331 = vmatprep.subr.mxu0 %v288
    %332 = vmatpush1.msra.mxu0 %v287
    %333 = vmatprep.subr.mxu0 %v290
    %334 = vmatpush1.msra.mxu0 %v289
    %335 = vmatprep.subr.mxu0 %v292
    %336 = vmatpush1.msra.mxu0 %v291
    %337 = vmatprep.subr.mxu0 %v294
    %338 = vmatpush1.msra.mxu0 %v293
    %339 = vmatprep.subr.mxu0 %v296
    %340 = vmatpush1.msra.mxu0 %v295
    %341 = vmatprep.subr.mxu0 %v298
    %342 = vmatpush1.msra.mxu0 %v297
    %343 = vmatprep.subr.mxu0 %v300
    %344 = vmatpush1.msra.mxu0 %v299
    %345 = vmatprep.subr.mxu0 %v302
    %346 = vmatpush1.msra.mxu0 %v301
    %347 = vmatprep.subr.mxu0 %v304
    %348 = vmatpush1.msra.mxu0 %v303
    %349 = vmatprep.subr.mxu0 %v306
    %350 = vmatpush1.msra.mxu0 %v305
    %351 = vmatprep.subr.mxu0 %v308
    %352 = vmatpush1.msra.mxu0 %v307
    %353 = vmatprep.subr.mxu0 %v310
    %354 = vmatpush1.msra.mxu0 %v309
    %355 = vmatprep.subr.mxu0 %v312
    %356 = vmatpush1.msra.mxu0 %v311
    %357 = vmatprep.subr.mxu0 %v314
    %358 = vmatpush1.msra.mxu0 %v313
    %359 = vmatprep.subr.mxu0 0.0
    %360 = vmatpush1.msra.mxu0 0.0
    %361 = vmatprep.subr.mxu0 0.0
    %362 = vmatpush1.msra.mxu0 0.0
    %363 = vmatprep.subr.mxu0 0.0
    %364 = vmatpush1.msra.mxu0 0.0
    %365 = vmatprep.subr.mxu0 0.0
    %366 = vmatpush1.msra.mxu0 0.0
    %367 = vmatprep.subr.mxu0 0.0
    %368 = vmatpush1.msra.mxu0 0.0
    %369 = vmatprep.subr.mxu0 0.0
    %370 = vmatpush1.msra.mxu0 0.0
    %371 = vmatprep.subr.mxu0 0.0
    %372 = vmatpush1.msra.mxu0 0.0
    %373 = vmatprep.subr.mxu0 0.0
    %374 = vmatpush1.msra.mxu0 0.0
    %375 = vmatprep.subr.mxu0 0.0
    %376 = vmatpush1.msra.mxu0 0.0
    %377 = vmatprep.subr.mxu0 0.0
    %378 = vmatpush1.msra.mxu0 0.0
    %379 = vmatprep.subr.mxu0 0.0
    %380 = vmatpush1.msra.mxu0 0.0
    %381 = vmatprep.subr.mxu0 0.0
    %382 = vmatpush1.msra.mxu0 0.0
    %383 = vmatprep.subr.mxu0 0.0
    %384 = vmatpush1.msra.mxu0 0.0
    %385 = vmatprep.subr.mxu0 0.0
    %386 = vmatpush1.msra.mxu0 0.0
    %387 = vmatprep.subr.mxu0 0.0
    %388 = vmatpush1.msra.mxu0 0.0
    %389 = vmatprep.subr.mxu0 0.0
    %390 = vmatpush1.msra.mxu0 0.0
    %391 = vmatprep.mubr.f32.mxu0 0.0
    %392 = vmatmul.mubr.f32.gmra.mrb[0].mxu0 %v281
    %v393 = vpop.f32.mrb[0].mxu0
    %v394 = vadd.f32 %v320, %v393
    %v395 = vpop.f32.mrb[0].mxu0
    %v396 = vadd.f32 %v324, %v395
    %397 = vmatprep.mubr.f32.mxu0 0.0
    %398 = vmatmul.mubr.f32.gmra.mrb[0].mxu0 %v282
    %v399 = vpop.f32.mrb[0].mxu0
    %v400 = vadd.f32 %v320, %v399
    %v401 = vpop.f32.mrb[0].mxu0
    %v402 = vadd.f32 %v324, %v401
    %403 = vdwg.mxu0
    %404 = vst [vmem:[#allocation8] sm:$0xff] %v394
    %405 = vst [vmem:[#allocation8 + $0x8] sm:$0xff] %v396
    %406 = vst [vmem:[#allocation8 + $0x10] sm:$0xff] %v400
    %407 = vst [vmem:[#allocation8 + $0x18] sm:$0xff] %v402
    // Predicated region
    $region30: #{tpu_custom_call.1} parent=1 // pred_check
      _
    $region31: #{tpu_custom_call.1} parent=1 // pred_check_branch
      %409 = sbr.rel (0) target = $region33
    $region32: #{tpu_custom_call.1} parent=1 // pred_region
      %s411 = ssub.s32 512, 512
      %412 = vsyncadd [#allocation4], %s411
      %s413 = sshll.u32 [#allocation8], 4
      %s414 = int_to_ptr.vmem [resolvable:$true] %s413
      %419 = dma.vmem_to_hbm [thread:$0]  %s414, 512, %s4, [#allocation4], 256, 256, 16
    $region33: #{tpu_custom_call.1} parent=1 // pred_fallthru
      _
    // Predicated region
    $region34: #{tpu_custom_call.1} parent=1 // pred_check
      _
    $region35: #{tpu_custom_call.1} parent=1 // pred_check_branch
      %421 = sbr.rel (0) target = $region37
    $region36: #{tpu_custom_call.1} parent=1 // pred_region
      %422 = dma.done [#allocation4], 512
    $region37: #{tpu_custom_call.1} parent=1 // pred_fallthru
      _
    %423 = vsyncpa [#allocation3], 1
    %424 = vsyncpa [#allocation6], 1
    %425 = vsyncpa [#allocation4], 1

</llo_original>
